<compile_context>
chip_gen: v7x
topology: tpu7x:2x2x1
jax: 0.10.0
libtpu: 0.0.40
codegen_flags: <defaults>
</compile_context>

<pallas_src>
import jax
import jax.numpy as jnp
from jax.experimental import pallas as pl
from jax.experimental.pallas import tpu as pltpu


def _copy_kernel(x_ref, o_ref):
    # Identity copy of one lane-dense (tile_r, LANE) block through VMEM.
    o_ref[...] = x_ref[...]


# Lane width of the 2D slab fed to the kernel (multiple of 128).
_LANE = 512
# Max rows per block: 1024 * 512 * 4B = 2 MiB f32 per block.
_MAX_TILE_R = 1024


def to_matrix(x: jax.Array, rows: int, cols: int) -> jax.Array:
    """Pallas equivalent of ToMatrix(rows, cols).forward(x)."""
    total = x.size
    assert total % (rows * cols) == 0, "input size must be divisible by rows*cols"
    n = total // (rows * cols)

    # ---- layout plumbing (wrapper-side, data order unchanged) ----
    # Flatten row-major and view as a lane-dense 2D slab (R, _LANE).
    r = pl.cdiv(total, _LANE)
    tile_r = min(_MAX_TILE_R, ((r + 7) // 8) * 8)      # second-minor dim % 8 == 0
    r_pad = ((r + tile_r - 1) // tile_r) * tile_r       # grid evenly covers slab
    padded = r_pad * _LANE

    x_flat = jnp.ravel(x)
    if padded != total:
        # Pad tail so the slab is an exact multiple of the block; sliced off below.
        x_flat = jnp.pad(x_flat, (0, padded - total))
    x2d = jnp.reshape(x_flat, (r_pad, _LANE))

    # ---- the kernel: streaming copy at HBM roofline ----
    out2d = pl.pallas_call(
        _copy_kernel,
        out_shape=jax.ShapeDtypeStruct((r_pad, _LANE), x.dtype),
        grid=(r_pad // tile_r,),
        in_specs=[pl.BlockSpec((tile_r, _LANE), lambda i: (i, 0))],
        out_specs=pl.BlockSpec((tile_r, _LANE), lambda i: (i, 0)),
        compiler_params=pltpu.CompilerParams(
            # Row-tile axis is independent -> shards across both TCs on v7x.
            dimension_semantics=("parallel",),
        ),
    )(x2d)

    # ---- free reshapes back to the module's output shape ----
    out_flat = jnp.reshape(out2d, (-1,))[:total]
    return jnp.reshape(out_flat, (n, rows, cols))


if __name__ == "__main__":
    # ToMatrix has no parameters; only rows/cols config.
    rows, cols = 8, 32
    batch = 2

    key = jax.random.PRNGKey(0)
    # Flat feature vector per batch element, as the module expects.
    x = jax.random.normal(key, (batch, rows * cols), dtype=jnp.float32)

    y = to_matrix(x, rows, cols)
    y = jax.block_until_ready(y)

    # Sanity check against the pure-JAX reference of x.view(-1, rows, cols).
    ref = jnp.reshape(x, (-1, rows, cols))
    assert y.shape == (batch, rows, cols), y.shape
    assert y.dtype == x.dtype
    assert bool(jnp.array_equal(y, ref))

    print("KERNEL_OK")
</pallas_src>

<mosaic_0001>
module attributes {stable_mosaic.version = 11 : i64} {
  func.func @_copy_kernel(%arg0: i32, %arg1: memref<8x512xf32, #tpu.memory_space<vmem>>, %arg2: memref<8x512xf32, #tpu.memory_space<vmem>>) attributes {dimension_semantics = [#tpu.dimension_semantics<parallel>], iteration_bounds = array<i64: 1>, scalar_prefetch = 0 : i64, scratch_operands = 0 : i64, tpu.core_type = #tpu.core_type<tc>, window_params = [{transform_indices = @transform_0, window_bounds = array<i64: 8, 512>}, {transform_indices = @transform_1, window_bounds = array<i64: 8, 512>}]} {
    %c0 = arith.constant 0 : index
    %c0_0 = arith.constant 0 : index
    %0 = vector.load %arg1[%c0, %c0_0] : memref<8x512xf32, #tpu.memory_space<vmem>>, vector<8x512xf32>
    %c0_1 = arith.constant 0 : index
    %c0_2 = arith.constant 0 : index
    %1 = vector.load %arg2[%c0_1, %c0_2] : memref<8x512xf32, #tpu.memory_space<vmem>>, vector<8x512xf32>
    tpu.vector_store %arg2[%c0_1, %c0_2], %0 {strides = array<i32>} : memref<8x512xf32, #tpu.memory_space<vmem>>, vector<8x512xf32>,
    return
  }
  func.func @transform_0(%arg0: i32) -> (i32, i32) {
    %c0_i32 = arith.constant 0 : i32
    %c0_i32_0 = arith.constant 0 : i32
    return %arg0, %c0_i32 : i32, i32
  }
  func.func @transform_1(%arg0: i32) -> (i32, i32) {
    %c0_i32 = arith.constant 0 : i32
    %c0_i32_0 = arith.constant 0 : i32
    return %arg0, %c0_i32 : i32, i32
  }
}

</mosaic_0001>

<llo_original>
// kernel: tpu_custom_call.1
$region0: #{tpu_custom_call.1}
  #allocation0 [shape = 'u32[]', space=smem, size = 0x4, offset = 0x4, fixed_abs, tag = 'smem constant byte address 0x4 - core index']
  #allocation1 [shape = 'u32[144,128]{1,0:T(1,128)}', space=vmem, size = 0x12000, scoped, tag = 'internal scratch']
  %s0 = inlined_call_operand.hbm [shape: f32[8,512], index: 0, kind: input, shape index: {}]
  %s1 = inlined_call_operand.hbm [shape: f32[8,512], index: 1, kind: output, shape index: {}]
  %s2 = sld [smem:[#allocation0]]
  $region18: #{tpu_custom_call.1} parent=0
    _
  %s4 = ssub.s32 1, %s2
  %s5 = scalar_select 0, %s4, %s2
  $region1: #{tpu_custom_call.1} parent=0
    #allocation2 [shape = 'u8[16384]{0}', space=vmem, size = 0x4000, scoped, tag = 'input window, operand 0, single buffered']
    #allocation3 [shape = 's32[1]{0}', space=sflag, size = 0x4, scoped, tag = 'scoped memory for tpu_custom_call.1']
    #allocation4 [shape = 's32[1]{0}', space=sflag, size = 0x4, scoped, tag = 'scoped memory for tpu_custom_call.1']
    #allocation5 [shape = 'u8[16384]{0}', space=vmem, size = 0x4000, scoped, tag = 'output window, operand 0, single buffered']
    %6 = vsyncpa [#allocation3], 0
    %7 = vsyncpa [#allocation4], 0
    // Predicated region
    $region2: #{tpu_custom_call.1} parent=1 // pred_check
      _
    $region3: #{tpu_custom_call.1} parent=1 // pred_check_branch
      %9 = sbr.rel (0) target = $region5
    $region4: #{tpu_custom_call.1} parent=1 // pred_region
      %s11 = ssub.s32 512, 512
      %12 = vsyncadd [#allocation3], %s11
      %s14 = sshll.u32 [#allocation2], 4
      %s15 = int_to_ptr.vmem [resolvable:$true] %s14
      %17 = dma.hbm_to_vmem [thread:$0]  %s0, 512, %s15, [#allocation3]
    $region5: #{tpu_custom_call.1} parent=1 // pred_fallthru
      _
    // Predicated region
    $region6: #{tpu_custom_call.1} parent=1 // pred_check
      _
    $region7: #{tpu_custom_call.1} parent=1 // pred_check_branch
      %19 = sbr.rel (0) target = $region9
    $region8: #{tpu_custom_call.1} parent=1 // pred_region
      %20 = dma.done [#allocation3], 512
    $region9: #{tpu_custom_call.1} parent=1 // pred_fallthru
      _
    %v21 = vld [vmem:[#allocation2] sm:$0xff]
    %v22 = vld [vmem:[#allocation2 + $0x8] sm:$0xff]
    %v23 = vld [vmem:[#allocation2 + $0x10] sm:$0xff]
    %v24 = vld [vmem:[#allocation2 + $0x18] sm:$0xff]
    %25 = vst [vmem:[#allocation5] sm:$0xff] %v21
    %26 = vst [vmem:[#allocation5 + $0x8] sm:$0xff] %v22
    %27 = vst [vmem:[#allocation5 + $0x10] sm:$0xff] %v23
    %28 = vst [vmem:[#allocation5 + $0x18] sm:$0xff] %v24
    // Predicated region
    $region10: #{tpu_custom_call.1} parent=1 // pred_check
      _
    $region11: #{tpu_custom_call.1} parent=1 // pred_check_branch
      %30 = sbr.rel (0) target = $region13
    $region12: #{tpu_custom_call.1} parent=1 // pred_region
      %s32 = ssub.s32 512, 512
      %33 = vsyncadd [#allocation4], %s32
      %s35 = sshll.u32 [#allocation5], 4
      %s36 = int_to_ptr.vmem [resolvable:$true] %s35
      %38 = dma.vmem_to_hbm [thread:$0]  %s36, 512, %s1, [#allocation4]
    $region13: #{tpu_custom_call.1} parent=1 // pred_fallthru
      _
    // Predicated region
    $region14: #{tpu_custom_call.1} parent=1 // pred_check
      _
    $region15: #{tpu_custom_call.1} parent=1 // pred_check_branch
      %40 = sbr.rel (0) target = $region17
    $region16: #{tpu_custom_call.1} parent=1 // pred_region
      %41 = dma.done [#allocation4], 512
    $region17: #{tpu_custom_call.1} parent=1 // pred_fallthru
      _
    %42 = vsyncpa [#allocation3], 1
    %43 = vsyncpa [#allocation4], 1

</llo_original>
